<compile_context>
chip_gen: v5e
topology: v5e:2x2
jax: 0.10.0
libtpu: 0.0.40
codegen_flags: <defaults>
</compile_context>

<pallas_src>
import math
from functools import partial

import jax
import jax.numpy as jnp
from jax.experimental import pallas as pl
from jax.experimental.pallas import tpu as pltpu

_BIG = 1e30          # "infinite" distance for cross-batch masking / picked-neighbor exclusion
_LANE = 128
_SUBLANE = 8


def _round_up(v, m):
    return (v + m - 1) // m * m


def _pad_to(a, shape, value=0):
    pads = [(0, s - d) for d, s in zip(a.shape, shape)]
    return jnp.pad(a, pads, constant_values=value)


# ---------------------------------------------------------------------------
# Kernel A: fused knn_interpolate + (split, hoisted) Linear + ReLU, plus
#           BatchNorm pass 1 (per-tile per-channel sum / sum-of-squares).
# ---------------------------------------------------------------------------
def _fp_fused_kernel(pos_dst_ref, batch_dst_ref, skw_ref,          # tiled over Nd
                     pos_srcT_ref, batch_src_ref, xw1_ref,         # resident
                     h_ref, stats_ref, *, k, nd):
    t = pos_dst_ref.shape[0]
    pd = pos_dst_ref[...]                               # (T, 3)   f32
    bd = batch_dst_ref[...]                             # (T, 1)   i32
    ps_t = pos_srcT_ref[...]                            # (3, Ns)  f32
    bs = batch_src_ref[...]                             # (1, Ns)  i32
    ns = ps_t.shape[1]

    # Direct (a-b)^2 pairwise distances: three VPU broadcast FMAs. Exactly matches the
    # reference's formulation (no catastrophic cancellation) and keeps the MXU free for
    # the single big matmul below.
    d0 = pd[:, 0:1] - ps_t[0:1, :]
    d1 = pd[:, 1:2] - ps_t[1:2, :]
    d2 = pd[:, 2:3] - ps_t[2:3, :]
    dist = d0 * d0 + d1 * d1 + d2 * d2                              # (T, Ns)
    dist = jnp.where(bd != bs, _BIG, dist)                          # cross-batch mask

    # k rounds, ONE cross-lane reduction each (min); the selected neighbor is recovered by
    # an equality compare, and sum_w by a single final row-sum of the accumulated weights.
    # TODO(synk): if a batch element has fewer than k source points, masked (_BIG) entries
    # are re-picked with ~1e-30 weight (negligible), matching PyG only approximately; exact
    # f32 distance ties straddling the k-boundary pick all tied neighbors (measure-zero).
    w_acc = jnp.zeros((t, ns), jnp.float32)
    for _ in range(k):                                   # k is small & static
        m = jnp.min(dist, axis=1, keepdims=True)                    # (T, 1)  XLU reduce
        onehot = dist == m                                          # (T, Ns)
        w = 1.0 / jnp.maximum(m, 1e-16)                             # exact, (T, 1)
        w_acc = w_acc + jnp.where(onehot, w, 0.0)
        dist = jnp.where(onehot, _BIG, dist)                        # exclude picked
    sum_w = jnp.sum(w_acc, axis=1, keepdims=True)                   # (T, 1)

    # knn-interp + Linear fused; 1/sum_w applied AFTER the matmul on the (T, Hp) result:
    #   h = (W_acc @ (x_src @ W1)) / sum_w + (x_skip @ W2 + b)      (both hoists in wrapper)
    dt = xw1_ref.dtype
    h = jnp.dot(w_acc.astype(dt), xw1_ref[...], preferred_element_type=jnp.float32)
    h = h * (1.0 / sum_w) + skw_ref[...]
    h = jnp.maximum(h, 0.0)                                          # ReLU
    h_ref[...] = h

    # BatchNorm pass 1: per-tile partial per-channel sum / sum-of-squares (rows past the
    # true Nd are masked). No resident accumulator -> the grid axis stays "parallel".
    i = pl.program_id(0)
    rows = jax.lax.broadcasted_iota(jnp.int32, (t, 1), 0) + i * t
    hv = jnp.where(rows < nd, h, 0.0)
    stats_ref[0:1, :] = jnp.sum(hv, axis=0, keepdims=True)
    stats_ref[1:2, :] = jnp.sum(hv * hv, axis=0, keepdims=True)


# ---------------------------------------------------------------------------
# Kernel B: BatchNorm pass 2 — apply precomputed per-channel scale/shift.
# ---------------------------------------------------------------------------
def _bn_apply_kernel(h_ref, scale_ref, shift_ref, o_ref):
    o_ref[...] = h_ref[...] * scale_ref[...] + shift_ref[...]


# ---------------------------------------------------------------------------
# Wrapper
# ---------------------------------------------------------------------------
def fp_module_forward(x, pos, batch, x_skip, pos_skip, batch_skip, params, k,
                      *, tile_nd=None, feature_dtype=jnp.float32):
    """feature_dtype=jnp.bfloat16 quarters the resident xw1 VMEM footprint (useful on
    v7x's 64 MiB/TC); f32 accumulation is kept via preferred_element_type."""
    ns, f_in = x.shape
    nd = int(pos_skip.shape[0])
    w_full = params["w"].astype(jnp.float32)
    h_out = w_full.shape[1]

    # ---- generation-aware VMEM limit / default tile ---------------------------
    try:
        vmem_cap = int(pltpu.get_tpu_info().vmem_capacity_bytes)
    except Exception:                                   # interpret / non-TPU fallback
        vmem_cap = 128 * 1024 * 1024
    vmem_limit = max(32 * 1024 * 1024, min(vmem_cap // 2, 96 * 1024 * 1024))

    # ---- TPU-friendly padding --------------------------------------------------
    hp = _round_up(h_out, _LANE)                    # lane-dense hidden width
    ns_p = _round_up(ns, _LANE)                     # lane-dense source axis
    if tile_nd is None:                             # smaller tile on v7x when Ns is large
        tile_nd = 128 if (vmem_cap <= 64 * 1024 * 1024 and ns_p >= 4096) else 256
    t = min(_round_up(tile_nd, _SUBLANE), _round_up(nd, _SUBLANE))
    nd_p = _round_up(nd, t)
    n_tiles = nd_p // t

    # source-side arrays (resident across the whole grid)
    posT_p = _pad_to(pos.T.astype(jnp.float32), (3, ns_p))
    batch_src_p = _pad_to(batch.reshape(1, ns).astype(jnp.int32), (1, ns_p), value=-1)

    # target-side arrays (tiled over the Nd grid)
    pos_dst_p = _pad_to(pos_skip.astype(jnp.float32), (nd_p, 3))
    batch_dst_p = _pad_to(batch_skip.reshape(nd, 1).astype(jnp.int32), (nd_p, 1), value=-2)

    # Hoisted halves of the split Linear (XLA matmuls, done once):
    #   xw1 = x_src @ W1   (resident, lane-dense)
    #   skw = x_skip @ W2 + b  (tiled with the destination rows)
    w1 = w_full[:f_in]
    b_row = params["b"].astype(jnp.float32).reshape(1, h_out)
    if x_skip is None:
        skw = jnp.broadcast_to(b_row, (nd, h_out))
    else:
        w2 = w_full[f_in:]
        skw = x_skip.astype(jnp.float32) @ w2 + b_row
    skw_p = _pad_to(skw, (nd_p, hp))
    xw1 = _pad_to(x.astype(jnp.float32) @ w1, (ns_p, hp)).astype(feature_dtype)

    gamma_p = _pad_to(params["gamma"].astype(jnp.float32).reshape(1, h_out), (1, hp))
    beta_p = _pad_to(params["beta"].astype(jnp.float32).reshape(1, h_out), (1, hp))

    # ---- Kernel A: fused interp + Linear + ReLU, per-tile BN partial stats -----
    h, stats = pl.pallas_call(
        partial(_fp_fused_kernel, k=int(k), nd=nd),
        grid=(n_tiles,),
        in_specs=[
            pl.BlockSpec((t, 3), lambda i: (i, 0)),        # pos_dst   (tiled)
            pl.BlockSpec((t, 1), lambda i: (i, 0)),        # batch_dst (tiled)
            pl.BlockSpec((t, hp), lambda i: (i, 0)),       # x_skip@W2 + b (tiled)
            pl.BlockSpec((3, ns_p), lambda i: (0, 0)),     # pos_srcT  (resident)
            pl.BlockSpec((1, ns_p), lambda i: (0, 0)),     # batch_src (resident)
            pl.BlockSpec((ns_p, hp), lambda i: (0, 0)),    # x_src @ W1 (resident)
        ],
        out_specs=(
            pl.BlockSpec((t, hp), lambda i: (i, 0)),             # h = ReLU(Linear(...))
            pl.BlockSpec((_SUBLANE, hp), lambda i: (i, 0)),      # per-tile BN partials
        ),
        out_shape=(jax.ShapeDtypeStruct((nd_p, hp), jnp.float32),
                   jax.ShapeDtypeStruct((n_tiles * _SUBLANE, hp), jnp.float32)),
        compiler_params=pltpu.CompilerParams(
            dimension_semantics=("parallel",),            # no cross-tile accumulator
            vmem_limit_bytes=vmem_limit),
    )(pos_dst_p, batch_dst_p, skw_p, posT_p, batch_src_p, xw1)

    # BN parameters from exact training-mode batch stats (tiny XLA reduction over tiles).
    # TODO(synk): running_mean / running_var buffer updates of BatchNorm1d are not produced.
    n = jnp.float32(nd)
    stats_r = stats.reshape(n_tiles, _SUBLANE, hp)
    s1 = jnp.sum(stats_r[:, 0, :], axis=0, keepdims=True)
    s2 = jnp.sum(stats_r[:, 1, :], axis=0, keepdims=True)
    mean = s1 / n
    var = jnp.maximum(s2 / n - mean * mean, 0.0)          # biased variance
    scale = gamma_p * jax.lax.rsqrt(var + 1e-5)
    shift = beta_p - mean * scale

    # ---- Kernel B: HBM-bound scale/shift; bigger row tile, output aliased onto h ----
    tb = t * math.gcd(n_tiles, max(1, 1024 // t))
    out = pl.pallas_call(
        _bn_apply_kernel,
        grid=(nd_p // tb,),
        in_specs=[pl.BlockSpec((tb, hp), lambda i: (i, 0)),
                  pl.BlockSpec((1, hp), lambda i: (0, 0)),
                  pl.BlockSpec((1, hp), lambda i: (0, 0))],
        out_specs=pl.BlockSpec((tb, hp), lambda i: (i, 0)),
        out_shape=jax.ShapeDtypeStruct((nd_p, hp), jnp.float32),
        input_output_aliases={0: 0},                      # write back into the h buffer
        compiler_params=pltpu.CompilerParams(
            dimension_semantics=("parallel",),
            vmem_limit_bytes=vmem_limit),
    )(h, scale, shift)

    return out[:nd, :h_out], pos_skip, batch_skip


# ---------------------------------------------------------------------------
# Pure-JAX reference (torch_geometric / torch semantics) for a sanity check.
# ---------------------------------------------------------------------------
def _reference_forward(x, pos, batch, x_skip, pos_skip, batch_skip, params, k):
    d2 = jnp.sum((pos_skip[:, None, :] - pos[None, :, :]) ** 2, axis=-1)
    d2 = jnp.where(batch_skip[:, None] != batch[None, :], jnp.inf, d2)
    top_vals, top_idx = jax.lax.top_k(-d2, k)
    w = 1.0 / jnp.maximum(-top_vals, 1e-16)
    feats = x[top_idx]                                            # (Nd, k, F)
    y = jnp.sum(w[..., None] * feats, axis=1) / jnp.sum(w, axis=1, keepdims=True)
    h = jnp.concatenate([y, x_skip], axis=1) @ params["w"] + params["b"]
    h = jnp.maximum(h, 0.0)
    mean = h.mean(axis=0, keepdims=True)
    var = ((h - mean) ** 2).mean(axis=0, keepdims=True)
    return (h - mean) * jax.lax.rsqrt(var + 1e-5) * params["gamma"] + params["beta"]


# ---------------------------------------------------------------------------
if __name__ == "__main__":
    key = jax.random.PRNGKey(0)
    k_nn = 3
    n_src, n_dst = 16, 32          # coarse / fine point counts
    f_in, f_skip = 8, 8            # feature dims
    hidden = 32                    # NN output width
    n_batch = 2

    ks = jax.random.split(key, 8)
    x = jax.random.normal(ks[0], (n_src, f_in), jnp.float32)
    pos = jax.random.normal(ks[1], (n_src, 3), jnp.float32)
    x_skip = jax.random.normal(ks[2], (n_dst, f_skip), jnp.float32)
    pos_skip = jax.random.normal(ks[3], (n_dst, 3), jnp.float32)
    batch = jnp.repeat(jnp.arange(n_batch, dtype=jnp.int32), n_src // n_batch)
    batch_skip = jnp.repeat(jnp.arange(n_batch, dtype=jnp.int32), n_dst // n_batch)

    # NN = Linear(f_in + f_skip -> hidden) -> ReLU -> BatchNorm1d
    params = {
        "w": 0.1 * jax.random.normal(ks[4], (f_in + f_skip, hidden), jnp.float32),
        "b": 0.1 * jax.random.normal(ks[5], (hidden,), jnp.float32),
        "gamma": 1.0 + 0.1 * jax.random.normal(ks[6], (hidden,), jnp.float32),
        "beta": 0.1 * jax.random.normal(ks[7], (hidden,), jnp.float32),
    }

    out, pos_out, batch_out = fp_module_forward(
        x, pos, batch, x_skip, pos_skip, batch_skip, params, k_nn, tile_nd=16)
    out = jax.block_until_ready(out)

    assert out.shape == (n_dst, hidden)
    assert pos_out.shape == pos_skip.shape and batch_out.shape == batch_skip.shape
    assert bool(jnp.all(jnp.isfinite(out)))

    ref = _reference_forward(x, pos, batch, x_skip, pos_skip, batch_skip, params, k_nn)
    max_err = float(jnp.max(jnp.abs(out - ref)))
    assert jnp.allclose(out, ref, rtol=5e-2, atol=5e-2), max_err

    print("KERNEL_OK")
</pallas_src>

<mosaic_0001>
module attributes {stable_mosaic.version = 11 : i64} {
  func.func @_fp_fused_kernel(%arg0: i32, %arg1: memref<16x3xf32, #tpu.memory_space<vmem>>, %arg2: memref<16x1xi32, #tpu.memory_space<vmem>>, %arg3: memref<16x128xf32, #tpu.memory_space<vmem>>, %arg4: memref<3x128xf32, #tpu.memory_space<vmem>>, %arg5: memref<1x128xi32, #tpu.memory_space<vmem>>, %arg6: memref<128x128xf32, #tpu.memory_space<vmem>>, %arg7: memref<16x128xf32, #tpu.memory_space<vmem>>, %arg8: memref<8x128xf32, #tpu.memory_space<vmem>>) attributes {dimension_semantics = [#tpu.dimension_semantics<parallel>], iteration_bounds = array<i64: 2>, scalar_prefetch = 0 : i64, scratch_operands = 0 : i64, tpu.core_type = #tpu.core_type<tc>, window_params = [{transform_indices = @transform_0, window_bounds = array<i64: 16, 3>}, {transform_indices = @transform_1, window_bounds = array<i64: 16, 1>}, {transform_indices = @transform_2, window_bounds = array<i64: 16, 128>}, {pipeline_mode = #tpu.pipeline_mode<synchronous>, transform_indices = @transform_3, window_bounds = array<i64: 3, 128>}, {pipeline_mode = #tpu.pipeline_mode<synchronous>, transform_indices = @transform_4, window_bounds = array<i64: 1, 128>}, {pipeline_mode = #tpu.pipeline_mode<synchronous>, transform_indices = @transform_5, window_bounds = array<i64: 128, 128>}, {transform_indices = @transform_6, window_bounds = array<i64: 16, 128>}, {transform_indices = @transform_7, window_bounds = array<i64: 8, 128>}]} {
    %c0 = arith.constant 0 : index
    %c0_0 = arith.constant 0 : index
    %0 = vector.load %arg1[%c0, %c0_0] : memref<16x3xf32, #tpu.memory_space<vmem>>, vector<16x3xf32>
    %c0_1 = arith.constant 0 : index
    %c0_2 = arith.constant 0 : index
    %1 = vector.load %arg2[%c0_1, %c0_2] : memref<16x1xi32, #tpu.memory_space<vmem>>, vector<16x1xi32>
    %c0_3 = arith.constant 0 : index
    %c0_4 = arith.constant 0 : index
    %2 = vector.load %arg4[%c0_3, %c0_4] : memref<3x128xf32, #tpu.memory_space<vmem>>, vector<3x128xf32>
    %c0_5 = arith.constant 0 : index
    %c0_6 = arith.constant 0 : index
    %3 = vector.load %arg5[%c0_5, %c0_6] : memref<1x128xi32, #tpu.memory_space<vmem>>, vector<1x128xi32>
    %4 = vector.extract_strided_slice %0 {offsets = [0, 0], sizes = [16, 1], strides = [1, 1]} : vector<16x3xf32> to vector<16x1xf32>
    %5 = vector.extract_strided_slice %2 {offsets = [0, 0], sizes = [1, 128], strides = [1, 1]} : vector<3x128xf32> to vector<1x128xf32>
    %6 = vector.broadcast %4 : vector<16x1xf32> to vector<16x128xf32>
    %7 = vector.broadcast %5 : vector<1x128xf32> to vector<16x128xf32>
    %8 = arith.subf %6, %7 : vector<16x128xf32>
    %9 = vector.extract_strided_slice %0 {offsets = [0, 1], sizes = [16, 1], strides = [1, 1]} : vector<16x3xf32> to vector<16x1xf32>
    %10 = vector.extract_strided_slice %2 {offsets = [1, 0], sizes = [1, 128], strides = [1, 1]} : vector<3x128xf32> to vector<1x128xf32>
    %11 = vector.broadcast %9 : vector<16x1xf32> to vector<16x128xf32>
    %12 = vector.broadcast %10 : vector<1x128xf32> to vector<16x128xf32>
    %13 = arith.subf %11, %12 : vector<16x128xf32>
    %14 = vector.extract_strided_slice %0 {offsets = [0, 2], sizes = [16, 1], strides = [1, 1]} : vector<16x3xf32> to vector<16x1xf32>
    %15 = vector.extract_strided_slice %2 {offsets = [2, 0], sizes = [1, 128], strides = [1, 1]} : vector<3x128xf32> to vector<1x128xf32>
    %16 = vector.broadcast %14 : vector<16x1xf32> to vector<16x128xf32>
    %17 = vector.broadcast %15 : vector<1x128xf32> to vector<16x128xf32>
    %18 = arith.subf %16, %17 : vector<16x128xf32>
    %19 = arith.mulf %8, %8 : vector<16x128xf32>
    %20 = arith.mulf %13, %13 : vector<16x128xf32>
    %21 = arith.addf %19, %20 : vector<16x128xf32>
    %22 = arith.mulf %18, %18 : vector<16x128xf32>
    %23 = arith.addf %21, %22 : vector<16x128xf32>
    %24 = vector.broadcast %1 : vector<16x1xi32> to vector<16x128xi32>
    %25 = vector.broadcast %3 : vector<1x128xi32> to vector<16x128xi32>
    %26 = arith.cmpi ne, %24, %25 : vector<16x128xi32>
    %cst = arith.constant 1.000000e+30 : f32
    %27 = vector.broadcast %cst : f32 to vector<16x128xf32>
    %28 = arith.select %26, %27, %23 : vector<16x128xi1>, vector<16x128xf32>
    %cst_7 = arith.constant 0.000000e+00 : f32
    %29 = vector.broadcast %cst_7 : f32 to vector<16x128xf32>
    %cst_8 = arith.constant dense<0x7F800000> : vector<16xf32>
    %30 = vector.multi_reduction <minimumf>, %28, %cst_8 [1] : vector<16x128xf32> to vector<16xf32>
    %31 = vector.shape_cast %30 : vector<16xf32> to vector<16x1xf32>
    %32 = vector.broadcast %31 : vector<16x1xf32> to vector<16x128xf32>
    %33 = arith.cmpf oeq, %28, %32 : vector<16x128xf32>
    %cst_9 = arith.constant 1.000000e-16 : f32
    %34 = vector.broadcast %cst_9 : f32 to vector<16x1xf32>
    %35 = arith.maximumf %31, %34 : vector<16x1xf32>
    %cst_10 = arith.constant 1.000000e+00 : f32
    %36 = vector.broadcast %cst_10 : f32 to vector<16x1xf32>
    %37 = arith.divf %36, %35 : vector<16x1xf32>
    %cst_11 = arith.constant 0.000000e+00 : f32
    %38 = vector.shape_cast %37 : vector<16x1xf32> to vector<16x1xf32>
    %39 = vector.broadcast %38 : vector<16x1xf32> to vector<16x128xf32>
    %40 = vector.broadcast %cst_11 : f32 to vector<16x128xf32>
    %41 = arith.select %33, %39, %40 : vector<16x128xi1>, vector<16x128xf32>
    %42 = arith.addf %29, %41 : vector<16x128xf32>
    %cst_12 = arith.constant 1.000000e+30 : f32
    %43 = vector.broadcast %cst_12 : f32 to vector<16x128xf32>
    %44 = arith.select %33, %43, %28 : vector<16x128xi1>, vector<16x128xf32>
    %cst_13 = arith.constant dense<0x7F800000> : vector<16xf32>
    %45 = vector.multi_reduction <minimumf>, %44, %cst_13 [1] : vector<16x128xf32> to vector<16xf32>
    %46 = vector.shape_cast %45 : vector<16xf32> to vector<16x1xf32>
    %47 = vector.broadcast %46 : vector<16x1xf32> to vector<16x128xf32>
    %48 = arith.cmpf oeq, %44, %47 : vector<16x128xf32>
    %cst_14 = arith.constant 1.000000e-16 : f32
    %49 = vector.broadcast %cst_14 : f32 to vector<16x1xf32>
    %50 = arith.maximumf %46, %49 : vector<16x1xf32>
    %cst_15 = arith.constant 1.000000e+00 : f32
    %51 = vector.broadcast %cst_15 : f32 to vector<16x1xf32>
    %52 = arith.divf %51, %50 : vector<16x1xf32>
    %cst_16 = arith.constant 0.000000e+00 : f32
    %53 = vector.shape_cast %52 : vector<16x1xf32> to vector<16x1xf32>
    %54 = vector.broadcast %53 : vector<16x1xf32> to vector<16x128xf32>
    %55 = vector.broadcast %cst_16 : f32 to vector<16x128xf32>
    %56 = arith.select %48, %54, %55 : vector<16x128xi1>, vector<16x128xf32>
    %57 = arith.addf %42, %56 : vector<16x128xf32>
    %cst_17 = arith.constant 1.000000e+30 : f32
    %58 = vector.broadcast %cst_17 : f32 to vector<16x128xf32>
    %59 = arith.select %48, %58, %44 : vector<16x128xi1>, vector<16x128xf32>
    %cst_18 = arith.constant dense<0x7F800000> : vector<16xf32>
    %60 = vector.multi_reduction <minimumf>, %59, %cst_18 [1] : vector<16x128xf32> to vector<16xf32>
    %61 = vector.shape_cast %60 : vector<16xf32> to vector<16x1xf32>
    %62 = vector.broadcast %61 : vector<16x1xf32> to vector<16x128xf32>
    %63 = arith.cmpf oeq, %59, %62 : vector<16x128xf32>
    %cst_19 = arith.constant 1.000000e-16 : f32
    %64 = vector.broadcast %cst_19 : f32 to vector<16x1xf32>
    %65 = arith.maximumf %61, %64 : vector<16x1xf32>
    %cst_20 = arith.constant 1.000000e+00 : f32
    %66 = vector.broadcast %cst_20 : f32 to vector<16x1xf32>
    %67 = arith.divf %66, %65 : vector<16x1xf32>
    %cst_21 = arith.constant 0.000000e+00 : f32
    %68 = vector.shape_cast %67 : vector<16x1xf32> to vector<16x1xf32>
    %69 = vector.broadcast %68 : vector<16x1xf32> to vector<16x128xf32>
    %70 = vector.broadcast %cst_21 : f32 to vector<16x128xf32>
    %71 = arith.select %63, %69, %70 : vector<16x128xi1>, vector<16x128xf32>
    %72 = arith.addf %57, %71 : vector<16x128xf32>
    %cst_22 = arith.constant dense<0.000000e+00> : vector<16xf32>
    %73 = vector.multi_reduction <add>, %72, %cst_22 [1] : vector<16x128xf32> to vector<16xf32>
    %74 = vector.shape_cast %73 : vector<16xf32> to vector<16x1xf32>
    %c0_23 = arith.constant 0 : index
    %c0_24 = arith.constant 0 : index
    %75 = vector.load %arg6[%c0_23, %c0_24] : memref<128x128xf32, #tpu.memory_space<vmem>>, vector<128x128xf32>
    %cst_25 = arith.constant dense<0.000000e+00> : vector<16x128xf32>
    %76 = tpu.matmul %72, %75, %cst_25 {dimension_numbers = #tpu.dot_dimension_numbers<[1], [0], [0], [1], [0, 0, 1, 1], [], []>} : vector<16x128xf32>, vector<128x128xf32>, vector<16x128xf32> -> vector<16x128xf32>
    %cst_26 = arith.constant 1.000000e+00 : f32
    %77 = vector.broadcast %cst_26 : f32 to vector<16x1xf32>
    %78 = arith.divf %77, %74 : vector<16x1xf32>
    %79 = vector.broadcast %78 : vector<16x1xf32> to vector<16x128xf32>
    %80 = arith.mulf %76, %79 : vector<16x128xf32>
    %c0_27 = arith.constant 0 : index
    %c0_28 = arith.constant 0 : index
    %81 = vector.load %arg3[%c0_27, %c0_28] : memref<16x128xf32, #tpu.memory_space<vmem>>, vector<16x128xf32>
    %82 = arith.addf %80, %81 : vector<16x128xf32>
    %cst_29 = arith.constant 0.000000e+00 : f32
    %83 = vector.broadcast %cst_29 : f32 to vector<16x128xf32>
    %84 = arith.maximumf %82, %83 : vector<16x128xf32>
    %c0_30 = arith.constant 0 : index
    %c0_31 = arith.constant 0 : index
    %85 = vector.load %arg7[%c0_30, %c0_31] : memref<16x128xf32, #tpu.memory_space<vmem>>, vector<16x128xf32>
    tpu.vector_store %arg7[%c0_30, %c0_31], %84 {strides = array<i32>} : memref<16x128xf32, #tpu.memory_space<vmem>>, vector<16x128xf32>,
    %86 = tpu.iota {dimensions = array<i32: 0>} : vector<16x1xi32>
    %c16_i32 = arith.constant 16 : i32
    %87 = arith.muli %arg0, %c16_i32 : i32
    %88 = vector.broadcast %87 : i32 to vector<16x1xi32>
    %89 = arith.addi %86, %88 : vector<16x1xi32>
    %c32_i32 = arith.constant 32 : i32
    %90 = vector.broadcast %c32_i32 : i32 to vector<16x1xi32>
    %91 = arith.cmpi slt, %89, %90 : vector<16x1xi32>
    %cst_32 = arith.constant 0.000000e+00 : f32
    %92 = vector.shape_cast %91 : vector<16x1xi1> to vector<16x1xi1>
    %93 = vector.broadcast %92 : vector<16x1xi1> to vector<16x128xi1>
    %94 = vector.broadcast %cst_32 : f32 to vector<16x128xf32>
    %95 = arith.select %93, %84, %94 : vector<16x128xi1>, vector<16x128xf32>
    %cst_33 = arith.constant dense<0.000000e+00> : vector<128xf32>
    %96 = vector.multi_reduction <add>, %95, %cst_33 [0] : vector<16x128xf32> to vector<128xf32>
    %97 = vector.shape_cast %96 : vector<128xf32> to vector<1x128xf32>
    %c0_34 = arith.constant 0 : index
    %c0_35 = arith.constant 0 : index
    %98 = vector.load %arg8[%c0_34, %c0_35] : memref<8x128xf32, #tpu.memory_space<vmem>>, vector<1x128xf32>
    tpu.vector_store %arg8[%c0_34, %c0_35], %97 {strides = array<i32>} : memref<8x128xf32, #tpu.memory_space<vmem>>, vector<1x128xf32>,
    %99 = arith.mulf %95, %95 : vector<16x128xf32>
    %cst_36 = arith.constant dense<0.000000e+00> : vector<128xf32>
    %100 = vector.multi_reduction <add>, %99, %cst_36 [0] : vector<16x128xf32> to vector<128xf32>
    %101 = vector.shape_cast %100 : vector<128xf32> to vector<1x128xf32>
    %c1 = arith.constant 1 : index
    %c0_37 = arith.constant 0 : index
    %102 = vector.load %arg8[%c1, %c0_37] : memref<8x128xf32, #tpu.memory_space<vmem>>, vector<1x128xf32>
    tpu.vector_store %arg8[%c1, %c0_37], %101 {strides = array<i32>} : memref<8x128xf32, #tpu.memory_space<vmem>>, vector<1x128xf32>,
    return
  }
  func.func @transform_0(%arg0: i32) -> (i32, i32) {
    %c0_i32 = arith.constant 0 : i32
    %c0_i32_0 = arith.constant 0 : i32
    return %arg0, %c0_i32 : i32, i32
  }
  func.func @transform_1(%arg0: i32) -> (i32, i32) {
    %c0_i32 = arith.constant 0 : i32
    %c0_i32_0 = arith.constant 0 : i32
    return %arg0, %c0_i32 : i32, i32
  }
  func.func @transform_2(%arg0: i32) -> (i32, i32) {
    %c0_i32 = arith.constant 0 : i32
    %c0_i32_0 = arith.constant 0 : i32
    return %arg0, %c0_i32 : i32, i32
  }
  func.func @transform_3(%arg0: i32) -> (i32, i32) {
    %c0_i32 = arith.constant 0 : i32
    %c0_i32_0 = arith.constant 0 : i32
    %c0_i32_1 = arith.constant 0 : i32
    return %c0_i32, %c0_i32_0 : i32, i32
  }
  func.func @transform_4(%arg0: i32) -> (i32, i32) {
    %c0_i32 = arith.constant 0 : i32
    %c0_i32_0 = arith.constant 0 : i32
    %c0_i32_1 = arith.constant 0 : i32
    return %c0_i32, %c0_i32_0 : i32, i32
  }
  func.func @transform_5(%arg0: i32) -> (i32, i32) {
    %c0_i32 = arith.constant 0 : i32
    %c0_i32_0 = arith.constant 0 : i32
    %c0_i32_1 = arith.constant 0 : i32
    return %c0_i32, %c0_i32_0 : i32, i32
  }
  func.func @transform_6(%arg0: i32) -> (i32, i32) {
    %c0_i32 = arith.constant 0 : i32
    %c0_i32_0 = arith.constant 0 : i32
    return %arg0, %c0_i32 : i32, i32
  }
  func.func @transform_7(%arg0: i32) -> (i32, i32) {
    %c0_i32 = arith.constant 0 : i32
    %c0_i32_0 = arith.constant 0 : i32
    return %arg0, %c0_i32 : i32, i32
  }
}

</mosaic_0001>

<llo_original>
// kernel: tpu_custom_call.1
$region0: #{tpu_custom_call.1}
  #allocation0 [shape = 'u32[]', space=smem, size = 0x4, offset = 0x4, fixed_abs, tag = 'smem constant byte address 0x4 - core index']
  #allocation1 [shape = 'u32[72,128]{1,0:T(1,128)}', space=vmem, size = 0x9000, scoped, tag = 'internal scratch']
  %s0 = inlined_call_operand.vmem [shape: f32[32,3], index: 0, kind: input, shape index: {}]
  %s1 = inlined_call_operand.vmem [shape: s32[32,1], index: 1, kind: input, shape index: {}]
  %s2 = inlined_call_operand.vmem [shape: f32[32,128], index: 2, kind: input, shape index: {}]
  %s3 = inlined_call_operand.vmem [shape: f32[3,128], index: 3, kind: input, shape index: {}]
  %s4 = inlined_call_operand.vmem [shape: s32[1,128], index: 4, kind: input, shape index: {}]
  %s5 = inlined_call_operand.hbm [shape: f32[128,128], index: 5, kind: input, shape index: {}]
  %s6 = inlined_call_operand.hbm [shape: f32[32,128], index: 6, kind: output, shape index: {0}]
  %s7 = inlined_call_operand.hbm [shape: f32[16,128], index: 7, kind: output, shape index: {1}]
  %8 = xla_tuple %s6, %s7
  %s9 = sld [smem:[#allocation0]]
  $region69: #{tpu_custom_call.1} parent=0
    _
  %s11 = ssub.s32 1, %s9
  %s12 = scalar_select 0, %s11, %s9
  $region1: #{tpu_custom_call.1} parent=0
    #allocation2 [shape = 'u8[65536]{0}', space=vmem, size = 0x10000, scoped, tag = 'input window, operand 5, single buffered']
    #allocation3 [shape = 's32[2]{0}', space=sflag, size = 0x8, scoped, tag = 'scoped memory for tpu_custom_call.1']
    #allocation4 [shape = 's32[2]{0}', space=sflag, size = 0x8, scoped, tag = 'scoped memory for tpu_custom_call.1']
    #allocation5 [shape = 'u8[16384]{0}', space=vmem, size = 0x4000, scoped, tag = 'output window, operand 0']
    #allocation6 [shape = 'u8[8192]{0}', space=vmem, size = 0x2000, scoped, tag = 'output window, operand 1']
    #allocation7 [shape = 's32[2]{0}', space=sflag, size = 0x8, scoped, tag = 'scoped memory for tpu_custom_call.1']
    %13 = vsyncpa [#allocation3], 0
    %14 = vsyncpa [#allocation4], 0
    %s15 = scalar_lea.sflag [#allocation4], 1
    %16 = vsyncpa %s15, 0
    %17 = vsyncpa [#allocation7], 0
    %s18 = scalar_lea.sflag [#allocation7], 1
    %19 = vsyncpa %s18, 0
    loop: start=0, step=1, limit=4
    $region2: #{tpu_custom_call.1} parent=1 // loop_pre_header
      _
    $region3: #{tpu_custom_call.1} parent=1 // loop_header
      %s21 = sphi 0, %s25
      %p22 = scmp.ge.s32.totalorder %s21, 4
      %s31 = sphi 0, %s33
      %s34 = sphi 0, %s31
      %s35 = sphi 0, %s34
      %s51 = sphi 0, %s35
      %s57 = sphi 0, %s59
      %s60 = sphi 0, %s57
      %s61 = sphi 0, %s60
      %s77 = sphi 0, %s61
      %s83 = sphi 0, %s85
      %s86 = sphi 0, %s83
      %s87 = sphi 0, %s86
      %s103 = sphi 0, %s87
      %s107 = sphi 0, %s107
      %s109 = sphi 0, %s107
      %s110 = sphi 0, %s109
      %s124 = sphi 0, %s110
      %s128 = sphi 0, %s128
      %s130 = sphi 0, %s128
      %s131 = sphi 0, %s130
      %s145 = sphi 0, %s131
      %s149 = sphi 0, %s149
      %s151 = sphi 0, %s149
      %s152 = sphi 0, %s151
      %s166 = sphi 0, %s152
      %s172 = sphi 0, %s174
      %s175 = sphi 0, %s172
      %s176 = sphi 0, %s175
      %s192 = sphi 0, %s176
      %s198 = sphi 0, %s200
      %s201 = sphi 0, %s198
      %s202 = sphi 0, %s201
      %s218 = sphi 0, %s202
    $region4: #{tpu_custom_call.1} parent=1 // loop_header_branch
      %24 = sbr.rel (%p22) target = $region8
    $region5: #{tpu_custom_call.1} parent=1 // loop_body
      %s26 = ssub.s32 %s21, 1
      %s27 = ssub.s32 %s21, 2
      %s28 = sadd.s32 %s21, 1
      %s29 = ssub.s32 %s21, %s28
      %p30 = scmp.eq.s32.totalorder %s29, 0
      %s32 = sadd.s32 %s31, 1
      %s33 = scalar_select %p30, %s31, %s32
      %p36 = pneg %p30
      %p37 = scmp.eq.s32.totalorder %s21, 1
      %p38 = por %p36, %p37
      %p39 = scmp.ne.s32.totalorder %s31, %s34
      %p40 = scmp.eq.s32.totalorder %s21, 0
      %p41 = por %p39, %p40
      %p42 = scmp.ne.s32.totalorder %s31, %s34
      %p43 = scmp.eq.s32.totalorder %s26, 1
      %p44 = por %p42, %p43
      %p45 = scmp.ne.s32.totalorder %s34, %s35
      %p46 = scmp.eq.s32.totalorder %s26, 0
      %p47 = por %p45, %p46
      %p48 = scmp.ne.s32.totalorder %s34, %s35
      %p49 = scmp.eq.s32.totalorder %s27, 1
      %p50 = por %p48, %p49
      %p52 = scmp.ne.s32.totalorder %s35, %s51
      %p53 = scmp.eq.s32.totalorder %s27, 0
      %p54 = por %p52, %p53
      %s55 = ssub.s32 %s21, %s28
      %p56 = scmp.eq.s32.totalorder %s55, 0
      %s58 = sadd.s32 %s57, 1
      %s59 = scalar_select %p56, %s57, %s58
      %p62 = pneg %p56
      %p63 = scmp.eq.s32.totalorder %s21, 1
      %p64 = por %p62, %p63
      %p65 = scmp.ne.s32.totalorder %s57, %s60
      %p66 = scmp.eq.s32.totalorder %s21, 0
      %p67 = por %p65, %p66
      %p68 = scmp.ne.s32.totalorder %s57, %s60
      %p69 = scmp.eq.s32.totalorder %s26, 1
      %p70 = por %p68, %p69
      %p71 = scmp.ne.s32.totalorder %s60, %s61
      %p72 = scmp.eq.s32.totalorder %s26, 0
      %p73 = por %p71, %p72
      %p74 = scmp.ne.s32.totalorder %s60, %s61
      %p75 = scmp.eq.s32.totalorder %s27, 1
      %p76 = por %p74, %p75
      %p78 = scmp.ne.s32.totalorder %s61, %s77
      %p79 = scmp.eq.s32.totalorder %s27, 0
      %p80 = por %p78, %p79
      %s81 = ssub.s32 %s21, %s28
      %p82 = scmp.eq.s32.totalorder %s81, 0
      %s84 = sadd.s32 %s83, 1
      %s85 = scalar_select %p82, %s83, %s84
      %p88 = pneg %p82
      %p89 = scmp.eq.s32.totalorder %s21, 1
      %p90 = por %p88, %p89
      %p91 = scmp.ne.s32.totalorder %s83, %s86
      %p92 = scmp.eq.s32.totalorder %s21, 0
      %p93 = por %p91, %p92
      %p94 = scmp.ne.s32.totalorder %s83, %s86
      %p95 = scmp.eq.s32.totalorder %s26, 1
      %p96 = por %p94, %p95
      %p97 = scmp.ne.s32.totalorder %s86, %s87
      %p98 = scmp.eq.s32.totalorder %s26, 0
      %p99 = por %p97, %p98
      %p100 = scmp.ne.s32.totalorder %s86, %s87
      %p101 = scmp.eq.s32.totalorder %s27, 1
      %p102 = por %p100, %p101
      %p104 = scmp.ne.s32.totalorder %s87, %s103
      %p105 = scmp.eq.s32.totalorder %s27, 0
      %p106 = por %p104, %p105
      %s108 = sadd.s32 %s107, 1
      %p111 = scmp.eq.s32.totalorder %s21, 1
      %p112 = scmp.ne.s32.totalorder %s107, %s109
      %p113 = scmp.eq.s32.totalorder %s21, 0
      %p114 = por %p112, %p113
      %p115 = scmp.ne.s32.totalorder %s107, %s109
      %p116 = scmp.eq.s32.totalorder %s26, 1
      %p117 = por %p115, %p116
      %p118 = scmp.ne.s32.totalorder %s109, %s110
      %p119 = scmp.eq.s32.totalorder %s26, 0
      %p120 = por %p118, %p119
      %p121 = scmp.ne.s32.totalorder %s109, %s110
      %p122 = scmp.eq.s32.totalorder %s27, 1
      %p123 = por %p121, %p122
      %p125 = scmp.ne.s32.totalorder %s110, %s124
      %p126 = scmp.eq.s32.totalorder %s27, 0
      %p127 = por %p125, %p126
      %s129 = sadd.s32 %s128, 1
      %p132 = scmp.eq.s32.totalorder %s21, 1
      %p133 = scmp.ne.s32.totalorder %s128, %s130
      %p134 = scmp.eq.s32.totalorder %s21, 0
      %p135 = por %p133, %p134
      %p136 = scmp.ne.s32.totalorder %s128, %s130
      %p137 = scmp.eq.s32.totalorder %s26, 1
      %p138 = por %p136, %p137
      %p139 = scmp.ne.s32.totalorder %s130, %s131
      %p140 = scmp.eq.s32.totalorder %s26, 0
      %p141 = por %p139, %p140
      %p142 = scmp.ne.s32.totalorder %s130, %s131
      %p143 = scmp.eq.s32.totalorder %s27, 1
      %p144 = por %p142, %p143
      %p146 = scmp.ne.s32.totalorder %s131, %s145
      %p147 = scmp.eq.s32.totalorder %s27, 0
      %p148 = por %p146, %p147
      %s150 = sadd.s32 %s149, 1
      %p153 = scmp.eq.s32.totalorder %s21, 1
      %p154 = scmp.ne.s32.totalorder %s149, %s151
      %p155 = scmp.eq.s32.totalorder %s21, 0
      %p156 = por %p154, %p155
      %p157 = scmp.ne.s32.totalorder %s149, %s151
      %p158 = scmp.eq.s32.totalorder %s26, 1
      %p159 = por %p157, %p158
      %p160 = scmp.ne.s32.totalorder %s151, %s152
      %p161 = scmp.eq.s32.totalorder %s26, 0
      %p162 = por %p160, %p161
      %p163 = scmp.ne.s32.totalorder %s151, %s152
      %p164 = scmp.eq.s32.totalorder %s27, 1
      %p165 = por %p163, %p164
      %p167 = scmp.ne.s32.totalorder %s152, %s166
      %p168 = scmp.eq.s32.totalorder %s27, 0
      %p169 = por %p167, %p168
      %s170 = ssub.s32 %s21, %s28
      %p171 = scmp.eq.s32.totalorder %s170, 0
      %s173 = sadd.s32 %s172, 1
      %s174 = scalar_select %p171, %s172, %s173
      %p177 = pneg %p171
      %p178 = scmp.eq.s32.totalorder %s21, 1
      %p179 = por %p177, %p178
      %p180 = scmp.ne.s32.totalorder %s172, %s175
      %p181 = scmp.eq.s32.totalorder %s21, 0
      %p182 = por %p180, %p181
      %p183 = scmp.ne.s32.totalorder %s172, %s175
      %p184 = scmp.eq.s32.totalorder %s26, 1
      %p185 = por %p183, %p184
      %p186 = scmp.ne.s32.totalorder %s175, %s176
      %p187 = scmp.eq.s32.totalorder %s26, 0
      %p188 = por %p186, %p187
      %p189 = scmp.ne.s32.totalorder %s175, %s176
      %p190 = scmp.eq.s32.totalorder %s27, 1
      %p191 = por %p189, %p190
      %p193 = scmp.ne.s32.totalorder %s176, %s192
      %p194 = scmp.eq.s32.totalorder %s27, 0
      %p195 = por %p193, %p194
      %s196 = ssub.s32 %s21, %s28
      %p197 = scmp.eq.s32.totalorder %s196, 0
      %s199 = sadd.s32 %s198, 1
      %s200 = scalar_select %p197, %s198, %s199
      %p203 = pneg %p197
      %p204 = scmp.eq.s32.totalorder %s21, 1
      %p205 = por %p203, %p204
      %p206 = scmp.ne.s32.totalorder %s198, %s201
      %p207 = scmp.eq.s32.totalorder %s21, 0
      %p208 = por %p206, %p207
      %p209 = scmp.ne.s32.totalorder %s198, %s201
      %p210 = scmp.eq.s32.totalorder %s26, 1
      %p211 = por %p209, %p210
      %p212 = scmp.ne.s32.totalorder %s201, %s202
      %p213 = scmp.eq.s32.totalorder %s26, 0
      %p214 = por %p212, %p213
      %p215 = scmp.ne.s32.totalorder %s201, %s202
      %p216 = scmp.eq.s32.totalorder %s27, 1
      %p217 = por %p215, %p216
      %p219 = scmp.ne.s32.totalorder %s202, %s218
      %p220 = scmp.eq.s32.totalorder %s27, 0
      %p221 = por %p219, %p220
      %p222 = scmp.le.s32.totalorder 1, %s21
      %p223 = scmp.lt.s32.totalorder %s21, 3
      %p224 = pnand %p222, %p223
      %p225 = pneg %p224
      // Predicated region
      $region9: #{tpu_custom_call.1} parent=5 // pred_check
        _
      $region10: #{tpu_custom_call.1} parent=5 // pred_check_branch
        %227 = sbr.rel (%p224) target = $region12
      $region11: #{tpu_custom_call.1} parent=5 // pred_region
        %s228 = ssub.s32 %s21, 1
        // Predicated region
        $region13: #{tpu_custom_call.1} parent=11 // pred_check
          %p229 = pneg %p120
        $region14: #{tpu_custom_call.1} parent=11 // pred_check_branch
          %231 = sbr.rel (%p229) target = $region16
        $region15: #{tpu_custom_call.1} parent=11 // pred_region
          _
        $region16: #{tpu_custom_call.1} parent=11 // pred_fallthru
          _
        // Predicated region
        $region17: #{tpu_custom_call.1} parent=11 // pred_check
          %p232 = pneg %p141
        $region18: #{tpu_custom_call.1} parent=11 // pred_check_branch
          %234 = sbr.rel (%p232) target = $region20
        $region19: #{tpu_custom_call.1} parent=11 // pred_region
          _
        $region20: #{tpu_custom_call.1} parent=11 // pred_fallthru
          _
        // Predicated region
        $region21: #{tpu_custom_call.1} parent=11 // pred_check
          %p235 = pneg %p162
        $region22: #{tpu_custom_call.1} parent=11 // pred_check_branch
          %237 = sbr.rel (%p235) target = $region24
        $region23: #{tpu_custom_call.1} parent=11 // pred_region
          %239 = vsyncadd [#allocation3], 0
          %s240 = sshll.u32 %s5, 4
          %s241 = int_to_ptr.hbm [resolvable:$true] %s240
          %s242 = sshll.u32 [#allocation2], 4
          %s243 = int_to_ptr.vmem [resolvable:$true] %s242
          %248 = dma.hbm_to_vmem [thread:$0]  %s241, 2048, %s243, [#allocation3], 128, 128, 8
        $region24: #{tpu_custom_call.1} parent=11 // pred_fallthru
          _
      $region12: #{tpu_custom_call.1} parent=5 // pred_fallthru
        _
      %p249 = scmp.lt.s32.totalorder %s21, 2
      // Predicated region
      $region25: #{tpu_custom_call.1} parent=5 // pred_check
        %p250 = pneg %p249
      $region26: #{tpu_custom_call.1} parent=5 // pred_check_branch
        %252 = sbr.rel (%p250) target = $region28
      $region27: #{tpu_custom_call.1} parent=5 // pred_region
        // Predicated region
        $region29: #{tpu_custom_call.1} parent=27 // pred_check
          %p253 = pneg %p41
        $region30: #{tpu_custom_call.1} parent=27 // pred_check_branch
          %255 = sbr.rel (%p253) target = $region32
        $region31: #{tpu_custom_call.1} parent=27 // pred_region
          %s256 = smul.u32 2, %s21
          %p257 = scmp.lt.s32.totalorder %s256, 3
          %s258 = scalar_select %p257, %s256, 3
          %s259 = smul.addr %s258, 8
          %s260 = scalar_lea.vmem %s0, %s259
          %s261 = smul.u32 2, %s21
        $region32: #{tpu_custom_call.1} parent=27 // pred_fallthru
          _
        // Predicated region
        $region33: #{tpu_custom_call.1} parent=27 // pred_check
          %p262 = pneg %p67
        $region34: #{tpu_custom_call.1} parent=27 // pred_check_branch
          %264 = sbr.rel (%p262) target = $region36
        $region35: #{tpu_custom_call.1} parent=27 // pred_region
          %s265 = smul.u32 2, %s21
          %p266 = scmp.lt.s32.totalorder %s265, 3
          %s267 = scalar_select %p266, %s265, 3
          %s268 = smul.addr %s267, 8
          %s269 = scalar_lea.vmem %s1, %s268
          %s270 = smul.u32 2, %s21
        $region36: #{tpu_custom_call.1} parent=27 // pred_fallthru
          _
        // Predicated region
        $region37: #{tpu_custom_call.1} parent=27 // pred_check
          %p271 = pneg %p93
        $region38: #{tpu_custom_call.1} parent=27 // pred_check_branch
          %273 = sbr.rel (%p271) target = $region40
        $region39: #{tpu_custom_call.1} parent=27 // pred_region
          %s274 = smul.u32 2, %s21
          %p275 = scmp.lt.s32.totalorder %s274, 3
          %s276 = scalar_select %p275, %s274, 3
          %s277 = smul.addr %s276, 8
          %s278 = scalar_lea.vmem %s2, %s277
          %s279 = smul.u32 2, %s21
        $region40: #{tpu_custom_call.1} parent=27 // pred_fallthru
          _
      $region28: #{tpu_custom_call.1} parent=5 // pred_fallthru
        _
      %p280 = scmp.le.s32.totalorder 1, %s21
      %p281 = scmp.lt.s32.totalorder %s21, 3
      %p282 = pnand %p280, %p281
      %p283 = pneg %p282
      // Predicated region
      $region41: #{tpu_custom_call.1} parent=5 // pred_check
        _
      $region42: #{tpu_custom_call.1} parent=5 // pred_check_branch
        %285 = sbr.rel (%p282) target = $region44
      $region43: #{tpu_custom_call.1} parent=5 // pred_region
        %s286 = ssub.s32 %s21, 1
        // Predicated region
        $region45: #{tpu_custom_call.1} parent=43 // pred_check
          %p287 = pneg %p162
        $region46: #{tpu_custom_call.1} parent=43 // pred_check_branch
          %289 = sbr.rel (%p287) target = $region48
        $region47: #{tpu_custom_call.1} parent=43 // pred_region
          %291 = dma.done [#allocation3], 2048
        $region48: #{tpu_custom_call.1} parent=43 // pred_fallthru
          _
        %s292 = smul.u32 2, %s26
        %p293 = scmp.lt.s32.totalorder %s292, 3
        %s294 = scalar_select %p293, %s292, 3
        %s295 = smul.addr %s294, 8
        %s296 = scalar_lea.vmem %s0, %s295
        %p297 = pneg %p47
        %p298 = pneg %p44
        %s299 = smul.u32 2, %s26
        %p300 = scmp.lt.s32.totalorder %s299, 3
        %s301 = scalar_select %p300, %s299, 3
        %s302 = smul.addr %s301, 8
        %s303 = scalar_lea.vmem %s1, %s302
        %p304 = pneg %p73
        %p305 = pneg %p70
        %s306 = smul.u32 2, %s26
        %p307 = scmp.lt.s32.totalorder %s306, 3
        %s308 = scalar_select %p307, %s306, 3
        %s309 = smul.addr %s308, 8
        %s310 = scalar_lea.vmem %s2, %s309
        %p311 = pneg %p99
        %p312 = pneg %p96
        %p313 = pneg %p120
        %p314 = pneg %p117
        %p315 = pneg %p141
        %p316 = pneg %p138
        %p317 = pneg %p162
        %p318 = pneg %p159
        %p319 = pneg %p188
        %p320 = pneg %p185
        %s321 = sand.u32 %s175, 1
        %s322 = scalar_lea.sflag [#allocation4], %s321
        %s323 = sand.u32 %s175, 1
        %s324 = smul.addr %s323, 16
        %s325 = scalar_lea.vmem [#allocation5], %s324
        %p326 = pneg %p214
        %p327 = pneg %p211
        %s328 = sand.u32 %s201, 1
        %s329 = scalar_lea.sflag [#allocation7], %s328
        %s330 = sand.u32 %s201, 1
        %s331 = smul.addr %s330, 8
        %s332 = scalar_lea.vmem [#allocation6], %s331
        %s333 = smul.u32 2, %s26
        %p334 = scmp.lt.s32.totalorder %s333, 3
        %s335 = scalar_select %p334, %s333, 3
        %s336 = smul.addr %s335, 8
        %s337 = scalar_lea.vmem %s0, %s336
        %s338 = smul.u32 2, %s26
        %s339 = smul.u32 2, %s26
        %p340 = scmp.lt.s32.totalorder %s339, 3
        %s341 = scalar_select %p340, %s339, 3
        %s342 = smul.addr %s341, 8
        %s343 = scalar_lea.vmem %s1, %s342
        %s344 = smul.u32 2, %s26
        %s345 = smul.u32 2, %s26
        %p346 = scmp.lt.s32.totalorder %s345, 3
        %s347 = scalar_select %p346, %s345, 3
        %s348 = smul.addr %s347, 8
        %s349 = scalar_lea.vmem %s2, %s348
        %s350 = smul.u32 2, %s26
        %s351 = smul.u32 2, %s26
        %v352 = vld [vmem:[%s337] sm:$0xff]
        %v353 = vld [vmem:[%s337 + $0x8] sm:$0xff]
        %v354 = vld [vmem:[%s343] sm:$0xff]
        %v355 = vld [vmem:[%s343 + $0x8] sm:$0xff]
        %v356 = vld [vmem:[%s3] sm:$0x7]
        %v357 = vld [vmem:[%s4] sm:$0x1]
        %359 = vset.pattern.permute.xlu0 0
        %360 = vperm.xlu0 %359, %v352
        %v361 = vpop.permute.xlu0 %360
        %364 = vset.pattern.permute.xlu0 0
        %365 = vperm.xlu0 %364, %v353
        %v366 = vpop.permute.xlu0 %365
        %v368 = vperm.slane %v356, 0
        %v369 = vsub.f32 %v361, %v368
        %v370 = vsub.f32 %v366, %v368
        %371 = vset.pattern.permute.xlu0 1
        %372 = vperm.xlu0 %371, %v352
        %v373 = vpop.permute.xlu0 %372
        %375 = vset.pattern.permute.xlu0 1
        %376 = vperm.xlu0 %375, %v353
        %v377 = vpop.permute.xlu0 %376
        %v379 = vperm.slane %v356, 1
        %v380 = vsub.f32 %v373, %v379
        %v381 = vsub.f32 %v377, %v379
        %382 = vset.pattern.permute.xlu0 2
        %383 = vperm.xlu0 %382, %v352
        %v384 = vpop.permute.xlu0 %383
        %386 = vset.pattern.permute.xlu0 2
        %387 = vperm.xlu0 %386, %v353
        %v388 = vpop.permute.xlu0 %387
        %v390 = vperm.slane %v356, 2
        %v391 = vsub.f32 %v384, %v390
        %v392 = vsub.f32 %v388, %v390
        %v393 = vmul.f32 %v369, %v369
        %v394 = vmul.f32 %v370, %v370
        %v395 = vmul.f32 %v380, %v380
        %v396 = vmul.f32 %v381, %v381
        %v397 = vadd.f32 %v393, %v395
        %v398 = vadd.f32 %v394, %v396
        %v399 = vmul.f32 %v391, %v391
        %v400 = vmul.f32 %v392, %v392
        %v401 = vadd.f32 %v397, %v399
        %v402 = vadd.f32 %v398, %v400
        %403 = vset.pattern.permute.xlu0 0
        %404 = vperm.xlu0 %403, %v354
        %v405 = vpop.permute.xlu0 %404
        %406 = vset.pattern.permute.xlu0 0
        %407 = vperm.xlu0 %406, %v355
        %v408 = vpop.permute.xlu0 %407
        %v409 = vperm.slane %v357, 0
        %vm410 = vcmp.ne.s32.totalorder %v405, %v409
        %vm411 = vcmp.ne.s32.totalorder %v408, %v409
        %v412 = vsel %vm410, 1e+30, %v401
        %v413 = vsel %vm411, 1e+30, %v402
        %414 = vmin.xlane.f32.xlu0 %v412
        %v415 = vpop.xlane.xlu0 %414
        %416 = vmin.xlane.f32.xlu0 %v413
        %v417 = vpop.xlane.xlu0 %416
        %vm418 = vcmp.eq.f32.partialorder %v412, %v415
        %vm419 = vcmp.eq.f32.partialorder %v413, %v417
        %v420 = vmax.f32 %v415, 1e-16
        %v421 = vmax.f32 %v417, 1e-16
        %v422 = vrcp.pop %v420
        %v423 = vmul.f32 %v420, %v422
        %v424 = vsub.f32 1.0, %v423
        %v425 = vmul.f32 %v422, %v424
        %v426 = vadd.f32 %v422, %v425
        %vm427 = vweird.f32 %v420
        %vm428 = vweird.f32 %v422
        %vm429 = vmor %vm427, %vm428
        %v430 = vsel %vm429, %v422, %v426
        %v431 = vand.u32 2147483647, %v420
        %vm432 = vcmp.eq.f32.partialorder %v431, 8.507059e+37
        %v433 = vand.u32 %v420, 2147483648
        %v434 = vor.u32 1.1754944e-38, %v433
        %v435 = vsel %vm432, %v434, %v430
        %v436 = vmul.f32 1.0, %v435
        %v437 = vrcp.pop %v421
        %v438 = vmul.f32 %v421, %v437
        %v439 = vsub.f32 1.0, %v438
        %v440 = vmul.f32 %v437, %v439
        %v441 = vadd.f32 %v437, %v440
        %vm442 = vweird.f32 %v421
        %vm443 = vweird.f32 %v437
        %vm444 = vmor %vm442, %vm443
        %v445 = vsel %vm444, %v437, %v441
        %v446 = vand.u32 2147483647, %v421
        %vm447 = vcmp.eq.f32.partialorder %v446, 8.507059e+37
        %v448 = vand.u32 %v421, 2147483648
        %v449 = vor.u32 1.1754944e-38, %v448
        %v450 = vsel %vm447, %v449, %v445
        %v451 = vmul.f32 1.0, %v450
        %v452 = vsel %vm418, %v436, 0.0
        %v453 = vsel %vm419, %v451, 0.0
        %v454 = vadd.f32 %v452, 0.0
        %v455 = vadd.f32 %v453, 0.0
        %v456 = vsel %vm418, 1e+30, %v412
        %v457 = vsel %vm419, 1e+30, %v413
        %458 = vmin.xlane.f32.xlu0 %v456
        %v459 = vpop.xlane.xlu0 %458
        %460 = vmin.xlane.f32.xlu0 %v457
        %v461 = vpop.xlane.xlu0 %460
        %vm462 = vcmp.eq.f32.partialorder %v456, %v459
        %vm463 = vcmp.eq.f32.partialorder %v457, %v461
        %v464 = vmax.f32 %v459, 1e-16
        %v465 = vmax.f32 %v461, 1e-16
        %v466 = vrcp.pop %v464
        %v467 = vmul.f32 %v464, %v466
        %v468 = vsub.f32 1.0, %v467
        %v469 = vmul.f32 %v466, %v468
        %v470 = vadd.f32 %v466, %v469
        %vm471 = vweird.f32 %v464
        %vm472 = vweird.f32 %v466
        %vm473 = vmor %vm471, %vm472
        %v474 = vsel %vm473, %v466, %v470
        %v475 = vand.u32 2147483647, %v464
        %vm476 = vcmp.eq.f32.partialorder %v475, 8.507059e+37
        %v477 = vand.u32 %v464, 2147483648
        %v478 = vor.u32 1.1754944e-38, %v477
        %v479 = vsel %vm476, %v478, %v474
        %v480 = vmul.f32 1.0, %v479
        %v481 = vrcp.pop %v465
        %v482 = vmul.f32 %v465, %v481
        %v483 = vsub.f32 1.0, %v482
        %v484 = vmul.f32 %v481, %v483
        %v485 = vadd.f32 %v481, %v484
        %vm486 = vweird.f32 %v465
        %vm487 = vweird.f32 %v481
        %vm488 = vmor %vm486, %vm487
        %v489 = vsel %vm488, %v481, %v485
        %v490 = vand.u32 2147483647, %v465
        %vm491 = vcmp.eq.f32.partialorder %v490, 8.507059e+37
        %v492 = vand.u32 %v465, 2147483648
        %v493 = vor.u32 1.1754944e-38, %v492
        %v494 = vsel %vm491, %v493, %v489
        %v495 = vmul.f32 1.0, %v494
        %v496 = vsel %vm462, %v480, 0.0
        %v497 = vsel %vm463, %v495, 0.0
        %v498 = vadd.f32 %v454, %v496
        %v499 = vadd.f32 %v455, %v497
        %v500 = vsel %vm462, 1e+30, %v456
        %v501 = vsel %vm463, 1e+30, %v457
        %502 = vmin.xlane.f32.xlu0 %v500
        %v503 = vpop.xlane.xlu0 %502
        %504 = vmin.xlane.f32.xlu0 %v501
        %v505 = vpop.xlane.xlu0 %504
        %vm506 = vcmp.eq.f32.partialorder %v500, %v503
        %vm507 = vcmp.eq.f32.partialorder %v501, %v505
        %v508 = vmax.f32 %v503, 1e-16
        %v509 = vmax.f32 %v505, 1e-16
        %v510 = vrcp.pop %v508
        %v511 = vmul.f32 %v508, %v510
        %v512 = vsub.f32 1.0, %v511
        %v513 = vmul.f32 %v510, %v512
        %v514 = vadd.f32 %v510, %v513
        %vm515 = vweird.f32 %v508
        %vm516 = vweird.f32 %v510
        %vm517 = vmor %vm515, %vm516
        %v518 = vsel %vm517, %v510, %v514
        %v519 = vand.u32 2147483647, %v508
        %vm520 = vcmp.eq.f32.partialorder %v519, 8.507059e+37
        %v521 = vand.u32 %v508, 2147483648
        %v522 = vor.u32 1.1754944e-38, %v521
        %v523 = vsel %vm520, %v522, %v518
        %v524 = vmul.f32 1.0, %v523
        %v525 = vrcp.pop %v509
        %v526 = vmul.f32 %v509, %v525
        %v527 = vsub.f32 1.0, %v526
        %v528 = vmul.f32 %v525, %v527
        %v529 = vadd.f32 %v525, %v528
        %vm530 = vweird.f32 %v509
        %vm531 = vweird.f32 %v525
        %vm532 = vmor %vm530, %vm531
        %v533 = vsel %vm532, %v525, %v529
        %v534 = vand.u32 2147483647, %v509
        %vm535 = vcmp.eq.f32.partialorder %v534, 8.507059e+37
        %v536 = vand.u32 %v509, 2147483648
        %v537 = vor.u32 1.1754944e-38, %v536
        %v538 = vsel %vm535, %v537, %v533
        %v539 = vmul.f32 1.0, %v538
        %v540 = vsel %vm506, %v524, 0.0
        %v541 = vsel %vm507, %v539, 0.0
        %v542 = vadd.f32 %v498, %v540
        %v543 = vadd.f32 %v499, %v541
        %544 = vadd.xlane.f32.xlu0 %v542
        %v545 = vpop.xlane.xlu0 %544
        %546 = vadd.xlane.f32.xlu0 %v543
        %v547 = vpop.xlane.xlu0 %546
        %v548 = vld [vmem:[#allocation2] sm:$0xff]
        %v549 = vld [vmem:[#allocation2 + $0x8] sm:$0xff]
        %v550 = vld [vmem:[#allocation2 + $0x10] sm:$0xff]
        %v551 = vld [vmem:[#allocation2 + $0x18] sm:$0xff]
        %v552 = vld [vmem:[#allocation2 + $0x20] sm:$0xff]
        %v553 = vld [vmem:[#allocation2 + $0x28] sm:$0xff]
        %v554 = vld [vmem:[#allocation2 + $0x30] sm:$0xff]
        %v555 = vld [vmem:[#allocation2 + $0x38] sm:$0xff]
        %v556 = vld [vmem:[#allocation2 + $0x40] sm:$0xff]
        %v557 = vld [vmem:[#allocation2 + $0x48] sm:$0xff]
        %v558 = vld [vmem:[#allocation2 + $0x50] sm:$0xff]
        %v559 = vld [vmem:[#allocation2 + $0x58] sm:$0xff]
        %v560 = vld [vmem:[#allocation2 + $0x60] sm:$0xff]
        %v561 = vld [vmem:[#allocation2 + $0x68] sm:$0xff]
        %v562 = vld [vmem:[#allocation2 + $0x70] sm:$0xff]
        %v563 = vld [vmem:[#allocation2 + $0x78] sm:$0xff]
        %564 = vmatpush.msra.mxu0 %v563
        %565 = vmatpush.msra.mxu0 %v562
        %566 = vmatpush.msra.mxu0 %v561
        %567 = vmatpush.msra.mxu0 %v560
        %568 = vmatpush.msra.mxu0 %v559
        %569 = vmatpush.msra.mxu0 %v558
        %570 = vmatpush.msra.mxu0 %v557
        %571 = vmatpush.msra.mxu0 %v556
        %572 = vmatpush.msra.mxu0 %v555
        %573 = vmatpush.msra.mxu0 %v554
        %574 = vmatpush.msra.mxu0 %v553
        %575 = vmatpush.msra.mxu0 %v552
        %576 = vmatpush.msra.mxu0 %v551
        %577 = vmatpush.msra.mxu0 %v550
        %578 = vmatpush.msra.mxu0 %v549
        %579 = vmatpush.msra.mxu0 %v548
        %580 = vmatmul.f32.gmra.mxu0 %v542
        %v581 = vpop.f32.mrf.mxu0
        %v582 = vadd.f32 0.0, %v581
        %583 = vmatmul.f32.gmra.mxu0 %v543
        %v584 = vpop.f32.mrf.mxu0
        %v585 = vadd.f32 0.0, %v584
        %586 = vdwg.mxu0
        %v587 = vrcp.pop %v545
        %v588 = vmul.f32 %v545, %v587
        %v589 = vsub.f32 1.0, %v588
        %v590 = vmul.f32 %v587, %v589
        %v591 = vadd.f32 %v587, %v590
        %vm592 = vweird.f32 %v545
        %vm593 = vweird.f32 %v587
        %vm594 = vmor %vm592, %vm593
        %v595 = vsel %vm594, %v587, %v591
        %v596 = vand.u32 2147483647, %v545
        %vm597 = vcmp.eq.f32.partialorder %v596, 8.507059e+37
        %v598 = vand.u32 %v545, 2147483648
        %v599 = vor.u32 1.1754944e-38, %v598
        %v600 = vsel %vm597, %v599, %v595
        %v601 = vmul.f32 1.0, %v600
        %v602 = vrcp.pop %v547
        %v603 = vmul.f32 %v547, %v602
        %v604 = vsub.f32 1.0, %v603
        %v605 = vmul.f32 %v602, %v604
        %v606 = vadd.f32 %v602, %v605
        %vm607 = vweird.f32 %v547
        %vm608 = vweird.f32 %v602
        %vm609 = vmor %vm607, %vm608
        %v610 = vsel %vm609, %v602, %v606
        %v611 = vand.u32 2147483647, %v547
        %vm612 = vcmp.eq.f32.partialorder %v611, 8.507059e+37
        %v613 = vand.u32 %v547, 2147483648
        %v614 = vor.u32 1.1754944e-38, %v613
        %v615 = vsel %vm612, %v614, %v610
        %v616 = vmul.f32 1.0, %v615
        %v617 = vmul.f32 %v582, %v601
        %v618 = vmul.f32 %v585, %v616
        %v619 = vld [vmem:[%s349] sm:$0xff]
        %v620 = vld [vmem:[%s349 + $0x8] sm:$0xff]
        %v621 = vadd.f32 %v617, %v619
        %v622 = vadd.f32 %v618, %v620
        %v623 = vmax.f32 %v621, 0.0
        %v624 = vmax.f32 %v622, 0.0
        %625 = vst [vmem:[%s325] sm:$0xff] %v623
        %626 = vst [vmem:[%s325 + $0x8] sm:$0xff] %v624
        %v627 = vlaneseq
        %v628 = vshrl.u32 %v627, 7
        %v629 = vadd.s32 %v628, 8
        %s630 = smul.u32 %s26, 16
        %v631 = vstv %s630
        %v632 = vadd.s32 %v628, %v631
        %v633 = vadd.s32 %v629, %v631
        %vm634 = vcmp.lt.s32.totalorder %v632, 32
        %vm635 = vcmp.lt.s32.totalorder %v633, 32
        %v636 = vsel %vm634, 1, 0
        %v637 = vsel %vm635, 1, 0
        %vm638 = vcmp.eq.s32.totalorder %v636, 1
        %vm639 = vcmp.eq.s32.totalorder %v637, 1
        %v640 = vsel %vm638, %v623, 0.0
        %v641 = vsel %vm639, %v624, 0.0
        %v642 = vadd.f32 %v640, %v641
        %v643 = vrot.slane %v642, 4
        %v644 = vadd.f32 %v642, %v643
        %v645 = vrot.slane %v644, 2
        %v646 = vadd.f32 %v644, %v645
        %v647 = vrot.slane %v646, 1
        %v648 = vadd.f32 %v646, %v647
        %649 = vst [vmem:[%s332] sm:$0x1] %v648
        %v650 = vmul.f32 %v640, %v640
        %v651 = vmul.f32 %v641, %v641
        %v652 = vadd.f32 %v650, %v651
        %v653 = vrot.slane %v652, 4
        %v654 = vadd.f32 %v652, %v653
        %v655 = vrot.slane %v654, 2
        %v656 = vadd.f32 %v654, %v655
        %v657 = vrot.slane %v656, 1
        %v658 = vadd.f32 %v656, %v657
        %659 = vst [vmem:[%s332 + $0x1] sm:$0x1] %v658
        %s660 = sand.u32 %s175, 1
        %s661 = scalar_lea.sflag [#allocation4], %s660
        %s662 = sand.u32 %s175, 1
        %s663 = smul.addr %s662, 16
        %s664 = scalar_lea.vmem [#allocation5], %s663
        %s665 = sand.u32 %s201, 1
        %s666 = scalar_lea.sflag [#allocation7], %s665
        %s667 = sand.u32 %s201, 1
        %s668 = smul.addr %s667, 8
        %s669 = scalar_lea.vmem [#allocation6], %s668
        // Predicated region
        $region49: #{tpu_custom_call.1} parent=43 // pred_check
          %p670 = pneg %p185
        $region50: #{tpu_custom_call.1} parent=43 // pred_check_branch
          %672 = sbr.rel (%p670) target = $region52
        $region51: #{tpu_custom_call.1} parent=43 // pred_region
          %s673 = smul.u32 2, %s26
          %675 = vsyncadd %s661, 0
          %s676 = smul.addr %s673, 8
          %s677 = scalar_lea.hbm %s6, %s676
          %s678 = sshll.u32 %s664, 4
          %s679 = int_to_ptr.vmem [resolvable:$true] %s678
          %s680 = sshll.u32 %s677, 4
          %s681 = int_to_ptr.hbm [resolvable:$true] %s680
          %686 = dma.vmem_to_hbm [thread:$0]  %s679, 256, %s681, %s661, 128, 128, 8
        $region52: #{tpu_custom_call.1} parent=43 // pred_fallthru
          _
        // Predicated region
        $region53: #{tpu_custom_call.1} parent=43 // pred_check
          %p687 = pneg %p211
        $region54: #{tpu_custom_call.1} parent=43 // pred_check_branch
          %689 = sbr.rel (%p687) target = $region56
        $region55: #{tpu_custom_call.1} parent=43 // pred_region
          %691 = vsyncadd %s666, 0
          %s692 = smul.addr %s26, 8
          %s693 = scalar_lea.hbm %s7, %s692
          %s695 = sshll.u32 %s669, 4
          %s696 = int_to_ptr.vmem [resolvable:$true] %s695
          %s697 = sshll.u32 %s693, 4
          %s698 = int_to_ptr.hbm [resolvable:$true] %s697
          %700 = dma.vmem_to_hbm [thread:$0]  %s696, 128, %s698, %s666
        $region56: #{tpu_custom_call.1} parent=43 // pred_fallthru
          _
      $region44: #{tpu_custom_call.1} parent=5 // pred_fallthru
        _
      %p701 = scmp.le.s32.totalorder 2, %s21
      // Predicated region
      $region57: #{tpu_custom_call.1} parent=5 // pred_check
        %p702 = pneg %p701
      $region58: #{tpu_custom_call.1} parent=5 // pred_check_branch
        %704 = sbr.rel (%p702) target = $region60
      $region59: #{tpu_custom_call.1} parent=5 // pred_region
        %s705 = ssub.s32 %s21, 2
        // Predicated region
        $region61: #{tpu_custom_call.1} parent=59 // pred_check
          %p706 = pneg %p191
        $region62: #{tpu_custom_call.1} parent=59 // pred_check_branch
          %708 = sbr.rel (%p706) target = $region64
        $region63: #{tpu_custom_call.1} parent=59 // pred_region
          %s709 = sand.u32 %s176, 1
          %s710 = scalar_lea.sflag [#allocation4], %s709
          %s711 = sand.u32 %s176, 1
          %s712 = smul.addr %s711, 16
          %s713 = scalar_lea.vmem [#allocation5], %s712
          %715 = dma.done %s710, 256
        $region64: #{tpu_custom_call.1} parent=59 // pred_fallthru
          _
        // Predicated region
        $region65: #{tpu_custom_call.1} parent=59 // pred_check
          %p716 = pneg %p217
        $region66: #{tpu_custom_call.1} parent=59 // pred_check_branch
          %718 = sbr.rel (%p716) target = $region68
        $region67: #{tpu_custom_call.1} parent=59 // pred_region
          %s719 = sand.u32 %s202, 1
          %s720 = scalar_lea.sflag [#allocation7], %s719
          %s721 = sand.u32 %s202, 1
          %s722 = smul.addr %s721, 8
          %s723 = scalar_lea.vmem [#allocation6], %s722
          %725 = dma.done %s720, 128
        $region68: #{tpu_custom_call.1} parent=59 // pred_fallthru
          _
      $region60: #{tpu_custom_call.1} parent=5 // pred_fallthru
        _
    $region6: #{tpu_custom_call.1} parent=1 // loop_footer
      %s25 = sadd.s32 1, %s21
    $region7: #{tpu_custom_call.1} parent=1 // loop_footer_branch
      %20 = sbr.rel target = $region3
    $region8: #{tpu_custom_call.1} parent=1 // loop_exit
      _
    %726 = vsyncpa [#allocation3], 1
    %s727 = scalar_lea.sflag [#allocation3], 1
    %728 = vsyncpa %s727, 1
    %729 = vsyncpa [#allocation4], 1
    %s730 = scalar_lea.sflag [#allocation4], 1
    %731 = vsyncpa %s730, 1
    %732 = vsyncpa [#allocation7], 1
    %s733 = scalar_lea.sflag [#allocation7], 1
    %734 = vsyncpa %s733, 1

</llo_original>
